<compile_context>
chip_gen: v6e
topology: v6e:2x2x1
jax: 0.10.0
libtpu: 0.0.40
codegen_flags: <defaults>
</compile_context>

<pallas_src>
import functools

import jax
import jax.numpy as jnp
from jax import lax
from jax.experimental import pallas as pl
from jax.experimental.pallas import tpu as pltpu


def _round_up(x, m):
    return (x + m - 1) // m * m


def _ms_loss_kernel(feats_all_ref, inv_col_ref, lab_row_ref, inv_row_ref,
                    lab_col_ref, out_ref, *, margin, thresh, scale_pos,
                    scale_neg, batch_size, tile_rows):
    i = pl.program_id(0)
    row0 = pl.multiple_of(i * tile_rows, tile_rows)

    # Query block sliced from the resident features (VMEM slice, no HBM DMA).
    blk = feats_all_ref[pl.ds(row0, tile_rows), :]              # (TB, Dp) mm dtype
    # Fold row inverse norms into the LHS: one (TB, Dp) multiply instead of a
    # (TB, Bp) broadcast multiply on the similarity tile.
    blk_n = (blk.astype(jnp.float32) * inv_row_ref[...]).astype(blk.dtype)

    # (TB, Bp) cosine-similarity tile: transpose-free MXU matmul (contract the
    # last dims of both operands), f32 accumulation, then column scaling (VPU).
    sim = lax.dot_general(
        blk_n, feats_all_ref[...],
        dimension_numbers=(((1,), (1,)), ((), ())),
        preferred_element_type=jnp.float32)
    sim = sim * inv_col_ref[...]

    lab_row = lab_row_ref[...]                                  # (1, Bp) int32
    lab_col = lab_col_ref[...]                                  # (TB, 1) int32
    same = lab_col == lab_row                                   # (TB, Bp)

    tb, bp = sim.shape
    col_g = lax.broadcasted_iota(jnp.int32, (1, bp), 1)
    row_g = lax.broadcasted_iota(jnp.int32, (tb, 1), 0) + i * tile_rows
    col_ok = col_g < batch_size                                 # mask padded cols
    row_ok = row_g < batch_size                                 # mask padded rows
    not_diag = row_g != col_g                                   # robust self-pair excl. (bf16)

    eps = 1e-5
    pos_mask_ = same & (sim < 1.0 - eps) & not_diag & col_ok    # pos_pair_ per row
    neg_mask_ = jnp.logical_not(same) & col_ok                  # neg_pair_ per row

    BIG = jnp.float32(10.0)                                     # |sim| <= ~1 sentinel
    pos_min = jnp.min(jnp.where(pos_mask_, sim, BIG), axis=1, keepdims=True)
    neg_max = jnp.max(jnp.where(neg_mask_, sim, -BIG), axis=1, keepdims=True)
    has_neg_ = neg_max > -BIG                                   # neg_pair_ nonempty

    # Hard mining (strict comparisons, thresholds folded into (TB, 1) bounds).
    d = sim - thresh                                            # reused by the exp term
    neg_thr = pos_min - (margin + thresh)                       # d > neg_thr <=> sim+margin > pos_min
    pos_thr = neg_max + (margin - thresh)                       # d < pos_thr <=> sim-margin < neg_max
    neg_mask = neg_mask_ & (d > neg_thr)
    pos_mask = pos_mask_ & ((d < pos_thr) | jnp.logical_not(has_neg_))

    # Single exp: pos/neg pairs are disjoint; select the exponent by `same`
    # BEFORE exp so every element is finite, then gate with the mined masks.
    t = jnp.where(same, (-scale_pos) * d, scale_neg * d)
    e = jnp.exp(t)
    pos_sum = jnp.sum(jnp.where(pos_mask, e, 0.0), axis=1, keepdims=True)   # (TB, 1)
    neg_sum = jnp.sum(jnp.where(neg_mask, e, 0.0), axis=1, keepdims=True)

    # Rows the PyTorch loop skips with `continue` contribute 0 (every selected
    # exp term is strictly positive in f32, so sum > 0 <=> mask nonempty).
    valid = (pos_sum > 0.0) & (neg_sum > 0.0) & row_ok

    pos_loss = (1.0 / scale_pos) * jnp.log(1.0 + pos_sum)
    neg_loss = (1.0 / scale_neg) * jnp.log(1.0 + neg_sum)
    row_loss = jnp.where(valid, pos_loss + neg_loss, 0.0)       # (TB, 1)

    # Lane-dense per-block partial sum (summed and divided by B in wrapper).
    out_ref[...] = jnp.full(out_ref.shape, jnp.sum(row_loss), dtype=out_ref.dtype)


def multi_similarity_loss(feats, labels, margin=0.1, thresh=0.5,
                          scale_pos=2.0, scale_neg=40.0, *,
                          block_rows=128, mm_dtype=jnp.bfloat16,
                          vmem_limit_bytes=32 * 1024 * 1024,
                          core_parallel=False):
    assert feats.shape[0] == labels.shape[0]
    B, D = feats.shape
    feats = feats.astype(jnp.float32)

    # Tile / pad sizes: D to lanes (128), B to sublanes (8) and the row tile.
    TB = min(int(block_rows), _round_up(B, 8))
    row_multiple = 2 * TB if core_parallel else TB   # v7x: even nblk -> balanced TCs
    Bp = _round_up(B, row_multiple)
    Dp = _round_up(D, 128)
    nblk = Bp // TB

    feats_p = jnp.zeros((Bp, Dp), jnp.float32).at[:B, :D].set(feats)
    feats_mm = feats_p.astype(mm_dtype)             # bf16 halves HBM/VMEM traffic
    itemsize = feats_mm.dtype.itemsize

    # torch F.normalize(p=2, dim=1, eps=1e-12)  ==  x * rsqrt(max(|x|^2, 1e-24)).
    # One inverse-norm vector, viewed along lanes (cols) and sublanes (rows).
    inv = lax.rsqrt(jnp.maximum(jnp.sum(feats_p * feats_p, axis=1), 1e-24))
    inv_col = inv.reshape(1, Bp)
    inv_row = inv.reshape(Bp, 1)

    lab = jnp.full((Bp,), jnp.int32(-2147483647), dtype=jnp.int32)
    lab = lab.at[:B].set(labels.astype(jnp.int32))
    lab_row = lab.reshape(1, Bp)
    lab_col = lab.reshape(Bp, 1)

    kernel = functools.partial(
        _ms_loss_kernel,
        margin=float(margin), thresh=float(thresh),
        scale_pos=float(scale_pos), scale_neg=float(scale_neg),
        batch_size=B, tile_rows=TB)

    cost = pl.CostEstimate(
        flops=2 * Bp * Bp * Dp,
        transcendentals=Bp * Bp,                      # fused single exp per pair
        bytes_accessed=Bp * Dp * itemsize + 4 * Bp * 4 + nblk * 8 * 128 * 4)

    row_sem = pltpu.CORE_PARALLEL if core_parallel else "parallel"

    def build_and_run(single_buffer_resident):
        def resident(shape):
            idx = lambda i: (0,) * len(shape)
            if single_buffer_resident:
                # Grid-invariant block: a single VMEM buffer is enough.
                return pl.BlockSpec(shape, idx, pipeline_mode=pl.Buffered(1))
            return pl.BlockSpec(shape, idx)

        return pl.pallas_call(
            kernel,
            out_shape=jax.ShapeDtypeStruct((nblk, 8, 128), jnp.float32),
            grid_spec=pltpu.PrefetchScalarGridSpec(
                num_scalar_prefetch=0,
                grid=(nblk,),
                in_specs=[
                    resident((Bp, Dp)),                        # feats, resident (RHS + sliced LHS)
                    resident((1, Bp)),                         # col inverse norms
                    resident((1, Bp)),                         # labels along lanes
                    pl.BlockSpec((TB, 1), lambda i: (i, 0)),   # row inverse norms (per block)
                    pl.BlockSpec((TB, 1), lambda i: (i, 0)),   # labels along sublanes (per block)
                ],
                out_specs=pl.BlockSpec((1, 8, 128), lambda i: (i, 0, 0)),
            ),
            compiler_params=pltpu.CompilerParams(
                dimension_semantics=(row_sem,),
                vmem_limit_bytes=int(vmem_limit_bytes)),
            cost_estimate=cost,
        )(feats_mm, inv_col, lab_row, inv_row, lab_col)

    try:
        partials = build_and_run(True)
    except Exception:
        # pipeline_mode=pl.Buffered(1) not supported on this backend/version:
        # fall back to the default (double-buffered) resident specs.
        partials = build_and_run(False)

    # sum(loss) / batch_size; 0 when no row is valid (matches torch.zeros([])).
    return jnp.sum(partials[:, 0, 0]) / jnp.float32(B)


if __name__ == "__main__":
    key = jax.random.PRNGKey(0)
    kf, kl = jax.random.split(key)

    B, D = 8, 32
    feats = jax.random.normal(kf, (B, D), dtype=jnp.float32)
    # A few classes so rows have both positive and negative pairs.
    labels = jax.random.randint(kl, (B,), 0, 3, dtype=jnp.int32)

    loss = multi_similarity_loss(feats, labels)
    jax.block_until_ready(loss)
    print("KERNEL_OK")
</pallas_src>

<mosaic_0001>
module attributes {stable_mosaic.version = 11 : i64} {
  func.func @_ms_loss_kernel(%arg0: i32, %arg1: memref<8x128xbf16, #tpu.memory_space<vmem>>, %arg2: memref<1x8xf32, #tpu.memory_space<vmem>>, %arg3: memref<1x8xi32, #tpu.memory_space<vmem>>, %arg4: memref<8x1xf32, #tpu.memory_space<vmem>>, %arg5: memref<8x1xi32, #tpu.memory_space<vmem>>, %arg6: memref<1x8x128xf32, #tpu.memory_space<vmem>>) attributes {dimension_semantics = [#tpu.dimension_semantics<parallel>], iteration_bounds = array<i64: 1>, scalar_prefetch = 0 : i64, scratch_operands = 0 : i64, tpu.core_type = #tpu.core_type<tc>, window_params = [{pipeline_mode = #tpu.pipeline_mode<synchronous>, transform_indices = @transform_0, window_bounds = array<i64: 8, 128>}, {pipeline_mode = #tpu.pipeline_mode<synchronous>, transform_indices = @transform_1, window_bounds = array<i64: 1, 8>}, {pipeline_mode = #tpu.pipeline_mode<synchronous>, transform_indices = @transform_2, window_bounds = array<i64: 1, 8>}, {transform_indices = @transform_3, window_bounds = array<i64: 8, 1>}, {transform_indices = @transform_4, window_bounds = array<i64: 8, 1>}, {transform_indices = @transform_5, window_bounds = array<i64: 1, 8, 128>}]} {
    %c8_i32 = arith.constant 8 : i32
    %0 = arith.muli %arg0, %c8_i32 : i32
    %1 = tpu.assume_multiple %0, 8 : i32
    %2 = arith.index_cast %1 : i32 to index
    %c0 = arith.constant 0 : index
    %3 = vector.load %arg1[%2, %c0] : memref<8x128xbf16, #tpu.memory_space<vmem>>, vector<8x128xbf16>
    %4 = arith.extf %3 : vector<8x128xbf16> to vector<8x128xf32>
    %c0_0 = arith.constant 0 : index
    %c0_1 = arith.constant 0 : index
    %5 = vector.load %arg4[%c0_0, %c0_1] : memref<8x1xf32, #tpu.memory_space<vmem>>, vector<8x1xf32>
    %6 = vector.broadcast %5 : vector<8x1xf32> to vector<8x128xf32>
    %7 = arith.mulf %4, %6 : vector<8x128xf32>
    %8 = arith.truncf %7 : vector<8x128xf32> to vector<8x128xbf16>
    %c0_2 = arith.constant 0 : index
    %c0_3 = arith.constant 0 : index
    %9 = vector.load %arg1[%c0_2, %c0_3] : memref<8x128xbf16, #tpu.memory_space<vmem>>, vector<8x128xbf16>
    %cst = arith.constant dense<0.000000e+00> : vector<8x8xf32>
    %10 = tpu.matmul %8, %9, %cst {dimension_numbers = #tpu.dot_dimension_numbers<[1], [1], [0], [0], [0, 0, 1, 0], [], []>} : vector<8x128xbf16>, vector<8x128xbf16>, vector<8x8xf32> -> vector<8x8xf32>
    %c0_4 = arith.constant 0 : index
    %c0_5 = arith.constant 0 : index
    %11 = vector.load %arg2[%c0_4, %c0_5] : memref<1x8xf32, #tpu.memory_space<vmem>>, vector<1x8xf32>
    %12 = vector.broadcast %11 : vector<1x8xf32> to vector<8x8xf32>
    %13 = arith.mulf %10, %12 : vector<8x8xf32>
    %c0_6 = arith.constant 0 : index
    %c0_7 = arith.constant 0 : index
    %14 = vector.load %arg3[%c0_6, %c0_7] : memref<1x8xi32, #tpu.memory_space<vmem>>, vector<1x8xi32>
    %c0_8 = arith.constant 0 : index
    %c0_9 = arith.constant 0 : index
    %15 = vector.load %arg5[%c0_8, %c0_9] : memref<8x1xi32, #tpu.memory_space<vmem>>, vector<8x1xi32>
    %16 = vector.broadcast %15 : vector<8x1xi32> to vector<8x8xi32>
    %17 = vector.broadcast %14 : vector<1x8xi32> to vector<8x8xi32>
    %18 = arith.cmpi eq, %16, %17 : vector<8x8xi32>
    %19 = tpu.iota {dimensions = array<i32: 1>} : vector<1x8xi32>
    %20 = tpu.iota {dimensions = array<i32: 0>} : vector<8x1xi32>
    %c8_i32_10 = arith.constant 8 : i32
    %21 = arith.muli %arg0, %c8_i32_10 : i32
    %22 = vector.broadcast %21 : i32 to vector<8x1xi32>
    %23 = arith.addi %20, %22 : vector<8x1xi32>
    %c8_i32_11 = arith.constant 8 : i32
    %24 = vector.broadcast %c8_i32_11 : i32 to vector<1x8xi32>
    %25 = arith.cmpi slt, %19, %24 : vector<1x8xi32>
    %c8_i32_12 = arith.constant 8 : i32
    %26 = vector.broadcast %c8_i32_12 : i32 to vector<8x1xi32>
    %27 = arith.cmpi slt, %23, %26 : vector<8x1xi32>
    %28 = vector.broadcast %23 : vector<8x1xi32> to vector<8x8xi32>
    %29 = vector.broadcast %19 : vector<1x8xi32> to vector<8x8xi32>
    %30 = arith.cmpi ne, %28, %29 : vector<8x8xi32>
    %cst_13 = arith.constant 0.999989986 : f32
    %31 = vector.broadcast %cst_13 : f32 to vector<8x8xf32>
    %32 = arith.cmpf olt, %13, %31 : vector<8x8xf32>
    %33 = arith.andi %18, %32 : vector<8x8xi1>
    %34 = arith.andi %33, %30 : vector<8x8xi1>
    %35 = vector.broadcast %25 : vector<1x8xi1> to vector<8x8xi1>
    %36 = arith.andi %34, %35 : vector<8x8xi1>
    %cst_14 = arith.constant dense<true> : vector<8x8xi1>
    %37 = arith.xori %18, %cst_14 : vector<8x8xi1>
    %38 = vector.broadcast %25 : vector<1x8xi1> to vector<8x8xi1>
    %39 = arith.andi %37, %38 : vector<8x8xi1>
    %cst_15 = arith.constant 1.000000e+01 : f32
    %40 = vector.broadcast %cst_15 : f32 to vector<8x8xf32>
    %41 = arith.select %36, %13, %40 : vector<8x8xi1>, vector<8x8xf32>
    %cst_16 = arith.constant dense<0x7F800000> : vector<8xf32>
    %42 = vector.multi_reduction <minimumf>, %41, %cst_16 [1] : vector<8x8xf32> to vector<8xf32>
    %43 = vector.shape_cast %42 : vector<8xf32> to vector<8x1xf32>
    %cst_17 = arith.constant 0.000000e+00 : f32
    %cst_18 = arith.constant 1.000000e+01 : f32
    %44 = arith.subf %cst_17, %cst_18 : f32
    %45 = vector.broadcast %44 : f32 to vector<8x8xf32>
    %46 = arith.select %39, %13, %45 : vector<8x8xi1>, vector<8x8xf32>
    %cst_19 = arith.constant dense<0xFF800000> : vector<8xf32>
    %47 = vector.multi_reduction <maximumf>, %46, %cst_19 [1] : vector<8x8xf32> to vector<8xf32>
    %48 = vector.shape_cast %47 : vector<8xf32> to vector<8x1xf32>
    %cst_20 = arith.constant 0.000000e+00 : f32
    %cst_21 = arith.constant 1.000000e+01 : f32
    %49 = arith.subf %cst_20, %cst_21 : f32
    %50 = vector.broadcast %49 : f32 to vector<8x1xf32>
    %51 = arith.cmpf ogt, %48, %50 : vector<8x1xf32>
    %cst_22 = arith.constant 5.000000e-01 : f32
    %52 = vector.broadcast %cst_22 : f32 to vector<8x8xf32>
    %53 = arith.subf %13, %52 : vector<8x8xf32>
    %cst_23 = arith.constant 6.000000e-01 : f32
    %54 = vector.broadcast %cst_23 : f32 to vector<8x1xf32>
    %55 = arith.subf %43, %54 : vector<8x1xf32>
    %cst_24 = arith.constant -4.000000e-01 : f32
    %56 = vector.broadcast %cst_24 : f32 to vector<8x1xf32>
    %57 = arith.addf %48, %56 : vector<8x1xf32>
    %58 = vector.broadcast %55 : vector<8x1xf32> to vector<8x8xf32>
    %59 = arith.cmpf ogt, %53, %58 : vector<8x8xf32>
    %60 = arith.andi %39, %59 : vector<8x8xi1>
    %61 = vector.broadcast %57 : vector<8x1xf32> to vector<8x8xf32>
    %62 = arith.cmpf olt, %53, %61 : vector<8x8xf32>
    %cst_25 = arith.constant dense<true> : vector<8x1xi1>
    %63 = arith.xori %51, %cst_25 : vector<8x1xi1>
    %64 = vector.broadcast %63 : vector<8x1xi1> to vector<8x8xi1>
    %65 = arith.ori %62, %64 : vector<8x8xi1>
    %66 = arith.andi %36, %65 : vector<8x8xi1>
    %cst_26 = arith.constant -2.000000e+00 : f32
    %67 = vector.broadcast %cst_26 : f32 to vector<8x8xf32>
    %68 = arith.mulf %67, %53 : vector<8x8xf32>
    %cst_27 = arith.constant 4.000000e+01 : f32
    %69 = vector.broadcast %cst_27 : f32 to vector<8x8xf32>
    %70 = arith.mulf %69, %53 : vector<8x8xf32>
    %71 = arith.select %18, %68, %70 : vector<8x8xi1>, vector<8x8xf32>
    %72 = math.exp %71 : vector<8x8xf32>
    %cst_28 = arith.constant 0.000000e+00 : f32
    %73 = vector.broadcast %cst_28 : f32 to vector<8x8xf32>
    %74 = arith.select %66, %72, %73 : vector<8x8xi1>, vector<8x8xf32>
    %cst_29 = arith.constant dense<0.000000e+00> : vector<8xf32>
    %75 = vector.multi_reduction <add>, %74, %cst_29 [1] : vector<8x8xf32> to vector<8xf32>
    %76 = vector.shape_cast %75 : vector<8xf32> to vector<8x1xf32>
    %cst_30 = arith.constant 0.000000e+00 : f32
    %77 = vector.broadcast %cst_30 : f32 to vector<8x8xf32>
    %78 = arith.select %60, %72, %77 : vector<8x8xi1>, vector<8x8xf32>
    %cst_31 = arith.constant dense<0.000000e+00> : vector<8xf32>
    %79 = vector.multi_reduction <add>, %78, %cst_31 [1] : vector<8x8xf32> to vector<8xf32>
    %80 = vector.shape_cast %79 : vector<8xf32> to vector<8x1xf32>
    %cst_32 = arith.constant 0.000000e+00 : f32
    %81 = vector.broadcast %cst_32 : f32 to vector<8x1xf32>
    %82 = arith.cmpf ogt, %76, %81 : vector<8x1xf32>
    %cst_33 = arith.constant 0.000000e+00 : f32
    %83 = vector.broadcast %cst_33 : f32 to vector<8x1xf32>
    %84 = arith.cmpf ogt, %80, %83 : vector<8x1xf32>
    %85 = arith.andi %82, %84 : vector<8x1xi1>
    %86 = arith.andi %85, %27 : vector<8x1xi1>
    %cst_34 = arith.constant 1.000000e+00 : f32
    %87 = vector.broadcast %cst_34 : f32 to vector<8x1xf32>
    %88 = arith.addf %87, %76 : vector<8x1xf32>
    %89 = math.log %88 : vector<8x1xf32>
    %cst_35 = arith.constant 5.000000e-01 : f32
    %90 = vector.broadcast %cst_35 : f32 to vector<8x1xf32>
    %91 = arith.mulf %90, %89 : vector<8x1xf32>
    %cst_36 = arith.constant 1.000000e+00 : f32
    %92 = vector.broadcast %cst_36 : f32 to vector<8x1xf32>
    %93 = arith.addf %92, %80 : vector<8x1xf32>
    %94 = math.log %93 : vector<8x1xf32>
    %cst_37 = arith.constant 2.500000e-02 : f32
    %95 = vector.broadcast %cst_37 : f32 to vector<8x1xf32>
    %96 = arith.mulf %95, %94 : vector<8x1xf32>
    %97 = arith.addf %91, %96 : vector<8x1xf32>
    %cst_38 = arith.constant 0.000000e+00 : f32
    %98 = vector.broadcast %cst_38 : f32 to vector<8x1xf32>
    %99 = arith.select %86, %97, %98 : vector<8x1xi1>, vector<8x1xf32>
    %100 = vector.shape_cast %99 : vector<8x1xf32> to vector<1x8x1xf32>
    %cst_39 = arith.constant dense<0.000000e+00> : vector<1xf32>
    %101 = vector.multi_reduction <add>, %100, %cst_39 [1, 2] : vector<1x8x1xf32> to vector<1xf32>
    %102 = vector.shape_cast %101 : vector<1xf32> to vector<1x1x1xf32>
    %103 = vector.extract %102[0, 0, 0] : f32 from vector<1x1x1xf32>
    %104 = vector.broadcast %103 : f32 to vector<1x8x128xf32>
    %c0_40 = arith.constant 0 : index
    %c0_41 = arith.constant 0 : index
    %c0_42 = arith.constant 0 : index
    %105 = vector.load %arg6[%c0_40, %c0_41, %c0_42] : memref<1x8x128xf32, #tpu.memory_space<vmem>>, vector<1x8x128xf32>
    tpu.vector_store %arg6[%c0_40, %c0_41, %c0_42], %104 {strides = array<i32>} : memref<1x8x128xf32, #tpu.memory_space<vmem>>, vector<1x8x128xf32>,
    return
  }
  func.func @transform_0(%arg0: i32) -> (i32, i32) {
    %c0_i32 = arith.constant 0 : i32
    %c0_i32_0 = arith.constant 0 : i32
    %c0_i32_1 = arith.constant 0 : i32
    return %c0_i32, %c0_i32_0 : i32, i32
  }
  func.func @transform_1(%arg0: i32) -> (i32, i32) {
    %c0_i32 = arith.constant 0 : i32
    %c0_i32_0 = arith.constant 0 : i32
    %c0_i32_1 = arith.constant 0 : i32
    return %c0_i32, %c0_i32_0 : i32, i32
  }
  func.func @transform_2(%arg0: i32) -> (i32, i32) {
    %c0_i32 = arith.constant 0 : i32
    %c0_i32_0 = arith.constant 0 : i32
    %c0_i32_1 = arith.constant 0 : i32
    return %c0_i32, %c0_i32_0 : i32, i32
  }
  func.func @transform_3(%arg0: i32) -> (i32, i32) {
    %c0_i32 = arith.constant 0 : i32
    %c0_i32_0 = arith.constant 0 : i32
    return %arg0, %c0_i32 : i32, i32
  }
  func.func @transform_4(%arg0: i32) -> (i32, i32) {
    %c0_i32 = arith.constant 0 : i32
    %c0_i32_0 = arith.constant 0 : i32
    return %arg0, %c0_i32 : i32, i32
  }
  func.func @transform_5(%arg0: i32) -> (i32, i32, i32) {
    %c0_i32 = arith.constant 0 : i32
    %c0_i32_0 = arith.constant 0 : i32
    %c0_i32_1 = arith.constant 0 : i32
    return %arg0, %c0_i32, %c0_i32_0 : i32, i32, i32
  }
}

module attributes {stable_mosaic.version = 11 : i64} {
  func.func @_ms_loss_kernel(%arg0: i32, %arg1: memref<8x128xbf16, #tpu.memory_space<vmem>>, %arg2: memref<1x8xf32, #tpu.memory_space<vmem>>, %arg3: memref<1x8xi32, #tpu.memory_space<vmem>>, %arg4: memref<8x1xf32, #tpu.memory_space<vmem>>, %arg5: memref<8x1xi32, #tpu.memory_space<vmem>>, %arg6: memref<1x8x128xf32, #tpu.memory_space<vmem>>) attributes {dimension_semantics = [#tpu.dimension_semantics<parallel>], iteration_bounds = array<i64: 1>, scalar_prefetch = 0 : i64, scratch_operands = 0 : i64, tpu.core_type = #tpu.core_type<tc>, window_params = [{pipeline_mode = #tpu.pipeline_mode<synchronous>, transform_indices = @transform_0, window_bounds = array<i64: 8, 128>}, {pipeline_mode = #tpu.pipeline_mode<synchronous>, transform_indices = @transform_1, window_bounds = array<i64: 1, 8>}, {pipeline_mode = #tpu.pipeline_mode<synchronous>, transform_indices = @transform_2, window_bounds = array<i64: 1, 8>}, {transform_indices = @transform_3, window_bounds = array<i64: 8, 1>}, {transform_indices = @transform_4, window_bounds = array<i64: 8, 1>}, {transform_indices = @transform_5, window_bounds = array<i64: 1, 8, 128>}]} {
    %c8_i32 = arith.constant 8 : i32
    %0 = arith.muli %arg0, %c8_i32 : i32
    %1 = tpu.assume_multiple %0, 8 : i32
    %2 = arith.index_cast %1 : i32 to index
    %c0 = arith.constant 0 : index
    %3 = vector.load %arg1[%2, %c0] : memref<8x128xbf16, #tpu.memory_space<vmem>>, vector<8x128xbf16>
    %4 = arith.extf %3 : vector<8x128xbf16> to vector<8x128xf32>
    %c0_0 = arith.constant 0 : index
    %c0_1 = arith.constant 0 : index
    %5 = vector.load %arg4[%c0_0, %c0_1] : memref<8x1xf32, #tpu.memory_space<vmem>>, vector<8x1xf32>
    %6 = vector.broadcast %5 : vector<8x1xf32> to vector<8x128xf32>
    %7 = arith.mulf %4, %6 : vector<8x128xf32>
    %8 = arith.truncf %7 : vector<8x128xf32> to vector<8x128xbf16>
    %c0_2 = arith.constant 0 : index
    %c0_3 = arith.constant 0 : index
    %9 = vector.load %arg1[%c0_2, %c0_3] : memref<8x128xbf16, #tpu.memory_space<vmem>>, vector<8x128xbf16>
    %cst = arith.constant dense<0.000000e+00> : vector<8x8xf32>
    %10 = tpu.matmul %8, %9, %cst {dimension_numbers = #tpu.dot_dimension_numbers<[1], [1], [0], [0], [0, 0, 1, 0], [], []>} : vector<8x128xbf16>, vector<8x128xbf16>, vector<8x8xf32> -> vector<8x8xf32>
    %c0_4 = arith.constant 0 : index
    %c0_5 = arith.constant 0 : index
    %11 = vector.load %arg2[%c0_4, %c0_5] : memref<1x8xf32, #tpu.memory_space<vmem>>, vector<1x8xf32>
    %12 = vector.broadcast %11 : vector<1x8xf32> to vector<8x8xf32>
    %13 = arith.mulf %10, %12 : vector<8x8xf32>
    %c0_6 = arith.constant 0 : index
    %c0_7 = arith.constant 0 : index
    %14 = vector.load %arg3[%c0_6, %c0_7] : memref<1x8xi32, #tpu.memory_space<vmem>>, vector<1x8xi32>
    %c0_8 = arith.constant 0 : index
    %c0_9 = arith.constant 0 : index
    %15 = vector.load %arg5[%c0_8, %c0_9] : memref<8x1xi32, #tpu.memory_space<vmem>>, vector<8x1xi32>
    %16 = vector.broadcast %15 : vector<8x1xi32> to vector<8x8xi32>
    %17 = vector.broadcast %14 : vector<1x8xi32> to vector<8x8xi32>
    %18 = arith.cmpi eq, %16, %17 : vector<8x8xi32>
    %19 = tpu.iota {dimensions = array<i32: 1>} : vector<1x8xi32>
    %20 = tpu.iota {dimensions = array<i32: 0>} : vector<8x1xi32>
    %c8_i32_10 = arith.constant 8 : i32
    %21 = arith.muli %arg0, %c8_i32_10 : i32
    %22 = vector.broadcast %21 : i32 to vector<8x1xi32>
    %23 = arith.addi %20, %22 : vector<8x1xi32>
    %c8_i32_11 = arith.constant 8 : i32
    %24 = vector.broadcast %c8_i32_11 : i32 to vector<1x8xi32>
    %25 = arith.cmpi slt, %19, %24 : vector<1x8xi32>
    %c8_i32_12 = arith.constant 8 : i32
    %26 = vector.broadcast %c8_i32_12 : i32 to vector<8x1xi32>
    %27 = arith.cmpi slt, %23, %26 : vector<8x1xi32>
    %28 = vector.broadcast %23 : vector<8x1xi32> to vector<8x8xi32>
    %29 = vector.broadcast %19 : vector<1x8xi32> to vector<8x8xi32>
    %30 = arith.cmpi ne, %28, %29 : vector<8x8xi32>
    %cst_13 = arith.constant 0.999989986 : f32
    %31 = vector.broadcast %cst_13 : f32 to vector<8x8xf32>
    %32 = arith.cmpf olt, %13, %31 : vector<8x8xf32>
    %33 = arith.andi %18, %32 : vector<8x8xi1>
    %34 = arith.andi %33, %30 : vector<8x8xi1>
    %35 = vector.broadcast %25 : vector<1x8xi1> to vector<8x8xi1>
    %36 = arith.andi %34, %35 : vector<8x8xi1>
    %cst_14 = arith.constant dense<true> : vector<8x8xi1>
    %37 = arith.xori %18, %cst_14 : vector<8x8xi1>
    %38 = vector.broadcast %25 : vector<1x8xi1> to vector<8x8xi1>
    %39 = arith.andi %37, %38 : vector<8x8xi1>
    %cst_15 = arith.constant 1.000000e+01 : f32
    %40 = vector.broadcast %cst_15 : f32 to vector<8x8xf32>
    %41 = arith.select %36, %13, %40 : vector<8x8xi1>, vector<8x8xf32>
    %cst_16 = arith.constant dense<0x7F800000> : vector<8xf32>
    %42 = vector.multi_reduction <minimumf>, %41, %cst_16 [1] : vector<8x8xf32> to vector<8xf32>
    %43 = vector.shape_cast %42 : vector<8xf32> to vector<8x1xf32>
    %cst_17 = arith.constant 0.000000e+00 : f32
    %cst_18 = arith.constant 1.000000e+01 : f32
    %44 = arith.subf %cst_17, %cst_18 : f32
    %45 = vector.broadcast %44 : f32 to vector<8x8xf32>
    %46 = arith.select %39, %13, %45 : vector<8x8xi1>, vector<8x8xf32>
    %cst_19 = arith.constant dense<0xFF800000> : vector<8xf32>
    %47 = vector.multi_reduction <maximumf>, %46, %cst_19 [1] : vector<8x8xf32> to vector<8xf32>
    %48 = vector.shape_cast %47 : vector<8xf32> to vector<8x1xf32>
    %cst_20 = arith.constant 0.000000e+00 : f32
    %cst_21 = arith.constant 1.000000e+01 : f32
    %49 = arith.subf %cst_20, %cst_21 : f32
    %50 = vector.broadcast %49 : f32 to vector<8x1xf32>
    %51 = arith.cmpf ogt, %48, %50 : vector<8x1xf32>
    %cst_22 = arith.constant 5.000000e-01 : f32
    %52 = vector.broadcast %cst_22 : f32 to vector<8x8xf32>
    %53 = arith.subf %13, %52 : vector<8x8xf32>
    %cst_23 = arith.constant 6.000000e-01 : f32
    %54 = vector.broadcast %cst_23 : f32 to vector<8x1xf32>
    %55 = arith.subf %43, %54 : vector<8x1xf32>
    %cst_24 = arith.constant -4.000000e-01 : f32
    %56 = vector.broadcast %cst_24 : f32 to vector<8x1xf32>
    %57 = arith.addf %48, %56 : vector<8x1xf32>
    %58 = vector.broadcast %55 : vector<8x1xf32> to vector<8x8xf32>
    %59 = arith.cmpf ogt, %53, %58 : vector<8x8xf32>
    %60 = arith.andi %39, %59 : vector<8x8xi1>
    %61 = vector.broadcast %57 : vector<8x1xf32> to vector<8x8xf32>
    %62 = arith.cmpf olt, %53, %61 : vector<8x8xf32>
    %cst_25 = arith.constant dense<true> : vector<8x1xi1>
    %63 = arith.xori %51, %cst_25 : vector<8x1xi1>
    %64 = vector.broadcast %63 : vector<8x1xi1> to vector<8x8xi1>
    %65 = arith.ori %62, %64 : vector<8x8xi1>
    %66 = arith.andi %36, %65 : vector<8x8xi1>
    %cst_26 = arith.constant -2.000000e+00 : f32
    %67 = vector.broadcast %cst_26 : f32 to vector<8x8xf32>
    %68 = arith.mulf %67, %53 : vector<8x8xf32>
    %cst_27 = arith.constant 4.000000e+01 : f32
    %69 = vector.broadcast %cst_27 : f32 to vector<8x8xf32>
    %70 = arith.mulf %69, %53 : vector<8x8xf32>
    %71 = arith.select %18, %68, %70 : vector<8x8xi1>, vector<8x8xf32>
    %72 = math.exp %71 : vector<8x8xf32>
    %cst_28 = arith.constant 0.000000e+00 : f32
    %73 = vector.broadcast %cst_28 : f32 to vector<8x8xf32>
    %74 = arith.select %66, %72, %73 : vector<8x8xi1>, vector<8x8xf32>
    %cst_29 = arith.constant dense<0.000000e+00> : vector<8xf32>
    %75 = vector.multi_reduction <add>, %74, %cst_29 [1] : vector<8x8xf32> to vector<8xf32>
    %76 = vector.shape_cast %75 : vector<8xf32> to vector<8x1xf32>
    %cst_30 = arith.constant 0.000000e+00 : f32
    %77 = vector.broadcast %cst_30 : f32 to vector<8x8xf32>
    %78 = arith.select %60, %72, %77 : vector<8x8xi1>, vector<8x8xf32>
    %cst_31 = arith.constant dense<0.000000e+00> : vector<8xf32>
    %79 = vector.multi_reduction <add>, %78, %cst_31 [1] : vector<8x8xf32> to vector<8xf32>
    %80 = vector.shape_cast %79 : vector<8xf32> to vector<8x1xf32>
    %cst_32 = arith.constant 0.000000e+00 : f32
    %81 = vector.broadcast %cst_32 : f32 to vector<8x1xf32>
    %82 = arith.cmpf ogt, %76, %81 : vector<8x1xf32>
    %cst_33 = arith.constant 0.000000e+00 : f32
    %83 = vector.broadcast %cst_33 : f32 to vector<8x1xf32>
    %84 = arith.cmpf ogt, %80, %83 : vector<8x1xf32>
    %85 = arith.andi %82, %84 : vector<8x1xi1>
    %86 = arith.andi %85, %27 : vector<8x1xi1>
    %cst_34 = arith.constant 1.000000e+00 : f32
    %87 = vector.broadcast %cst_34 : f32 to vector<8x1xf32>
    %88 = arith.addf %87, %76 : vector<8x1xf32>
    %89 = math.log %88 : vector<8x1xf32>
    %cst_35 = arith.constant 5.000000e-01 : f32
    %90 = vector.broadcast %cst_35 : f32 to vector<8x1xf32>
    %91 = arith.mulf %90, %89 : vector<8x1xf32>
    %cst_36 = arith.constant 1.000000e+00 : f32
    %92 = vector.broadcast %cst_36 : f32 to vector<8x1xf32>
    %93 = arith.addf %92, %80 : vector<8x1xf32>
    %94 = math.log %93 : vector<8x1xf32>
    %cst_37 = arith.constant 2.500000e-02 : f32
    %95 = vector.broadcast %cst_37 : f32 to vector<8x1xf32>
    %96 = arith.mulf %95, %94 : vector<8x1xf32>
    %97 = arith.addf %91, %96 : vector<8x1xf32>
    %cst_38 = arith.constant 0.000000e+00 : f32
    %98 = vector.broadcast %cst_38 : f32 to vector<8x1xf32>
    %99 = arith.select %86, %97, %98 : vector<8x1xi1>, vector<8x1xf32>
    %100 = vector.shape_cast %99 : vector<8x1xf32> to vector<1x8x1xf32>
    %cst_39 = arith.constant dense<0.000000e+00> : vector<1xf32>
    %101 = vector.multi_reduction <add>, %100, %cst_39 [1, 2] : vector<1x8x1xf32> to vector<1xf32>
    %102 = vector.shape_cast %101 : vector<1xf32> to vector<1x1x1xf32>
    %103 = vector.extract %102[0, 0, 0] : f32 from vector<1x1x1xf32>
    %104 = vector.broadcast %103 : f32 to vector<1x8x128xf32>
    %c0_40 = arith.constant 0 : index
    %c0_41 = arith.constant 0 : index
    %c0_42 = arith.constant 0 : index
    %105 = vector.load %arg6[%c0_40, %c0_41, %c0_42] : memref<1x8x128xf32, #tpu.memory_space<vmem>>, vector<1x8x128xf32>
    tpu.vector_store %arg6[%c0_40, %c0_41, %c0_42], %104 {strides = array<i32>} : memref<1x8x128xf32, #tpu.memory_space<vmem>>, vector<1x8x128xf32>,
    return
  }
  func.func @transform_0(%arg0: i32) -> (i32, i32) {
    %c0_i32 = arith.constant 0 : i32
    %c0_i32_0 = arith.constant 0 : i32
    %c0_i32_1 = arith.constant 0 : i32
    return %c0_i32, %c0_i32_0 : i32, i32
  }
  func.func @transform_1(%arg0: i32) -> (i32, i32) {
    %c0_i32 = arith.constant 0 : i32
    %c0_i32_0 = arith.constant 0 : i32
    %c0_i32_1 = arith.constant 0 : i32
    return %c0_i32, %c0_i32_0 : i32, i32
  }
  func.func @transform_2(%arg0: i32) -> (i32, i32) {
    %c0_i32 = arith.constant 0 : i32
    %c0_i32_0 = arith.constant 0 : i32
    %c0_i32_1 = arith.constant 0 : i32
    return %c0_i32, %c0_i32_0 : i32, i32
  }
  func.func @transform_3(%arg0: i32) -> (i32, i32) {
    %c0_i32 = arith.constant 0 : i32
    %c0_i32_0 = arith.constant 0 : i32
    return %arg0, %c0_i32 : i32, i32
  }
  func.func @transform_4(%arg0: i32) -> (i32, i32) {
    %c0_i32 = arith.constant 0 : i32
    %c0_i32_0 = arith.constant 0 : i32
    return %arg0, %c0_i32 : i32, i32
  }
  func.func @transform_5(%arg0: i32) -> (i32, i32, i32) {
    %c0_i32 = arith.constant 0 : i32
    %c0_i32_0 = arith.constant 0 : i32
    %c0_i32_1 = arith.constant 0 : i32
    return %arg0, %c0_i32, %c0_i32_0 : i32, i32, i32
  }
}

</mosaic_0001>

<llo_original>
// kernel: tpu_custom_call.1
$region0: #{tpu_custom_call.1}
  #allocation0 [shape = 'u32[]', space=smem, size = 0x4, offset = 0x4, fixed_abs, tag = 'smem constant byte address 0x4 - core index']
  #allocation1 [shape = 'u32[144,128]{1,0:T(1,128)}', space=vmem, size = 0x12000, scoped, tag = 'internal scratch']
  %s0 = inlined_call_operand.vmem [shape: bf16[8,128], index: 0, kind: input, shape index: {}]
  %s1 = inlined_call_operand.vmem [shape: f32[1,8], index: 1, kind: input, shape index: {}]
  %s2 = inlined_call_operand.vmem [shape: s32[1,8], index: 2, kind: input, shape index: {}]
  %s3 = inlined_call_operand.vmem [shape: f32[8,1], index: 3, kind: input, shape index: {}]
  %s4 = inlined_call_operand.vmem [shape: s32[8,1], index: 4, kind: input, shape index: {}]
  %s5 = inlined_call_operand.hbm [shape: f32[1,8,128], index: 5, kind: output, shape index: {}]
  %s6 = sld [smem:[#allocation0]]
  $region30: #{tpu_custom_call.1} parent=0
    _
  %s8 = ssub.s32 1, %s6
  %s9 = scalar_select 0, %s8, %s6
  $region1: #{tpu_custom_call.1} parent=0
    #allocation2 [shape = 'u8[4096]{0}', space=vmem, size = 0x1000, scoped, tag = 'output window, operand 0, single buffered']
    #allocation3 [shape = 's32[1]{0}', space=sflag, size = 0x4, scoped, tag = 'scoped memory for tpu_custom_call.1']
    %10 = vsyncpa [#allocation3], 0
    // Predicated region
    $region2: #{tpu_custom_call.1} parent=1 // pred_check
      _
    $region3: #{tpu_custom_call.1} parent=1 // pred_check_branch
      %12 = sbr.rel (0) target = $region5
    $region4: #{tpu_custom_call.1} parent=1 // pred_region
      _
    $region5: #{tpu_custom_call.1} parent=1 // pred_fallthru
      _
    // Predicated region
    $region6: #{tpu_custom_call.1} parent=1 // pred_check
      _
    $region7: #{tpu_custom_call.1} parent=1 // pred_check_branch
      %14 = sbr.rel (0) target = $region9
    $region8: #{tpu_custom_call.1} parent=1 // pred_region
      _
    $region9: #{tpu_custom_call.1} parent=1 // pred_fallthru
      _
    // Predicated region
    $region10: #{tpu_custom_call.1} parent=1 // pred_check
      _
    $region11: #{tpu_custom_call.1} parent=1 // pred_check_branch
      %16 = sbr.rel (0) target = $region13
    $region12: #{tpu_custom_call.1} parent=1 // pred_region
      _
    $region13: #{tpu_custom_call.1} parent=1 // pred_fallthru
      _
    // Predicated region
    $region14: #{tpu_custom_call.1} parent=1 // pred_check
      _
    $region15: #{tpu_custom_call.1} parent=1 // pred_check_branch
      %18 = sbr.rel (0) target = $region17
    $region16: #{tpu_custom_call.1} parent=1 // pred_region
      _
    $region17: #{tpu_custom_call.1} parent=1 // pred_fallthru
      _
    // Predicated region
    $region18: #{tpu_custom_call.1} parent=1 // pred_check
      _
    $region19: #{tpu_custom_call.1} parent=1 // pred_check_branch
      %20 = sbr.rel (0) target = $region21
    $region20: #{tpu_custom_call.1} parent=1 // pred_region
      _
    $region21: #{tpu_custom_call.1} parent=1 // pred_fallthru
      _
    %s22 = smul.u32 0, 8
    %s23 = sshra.s32 %s22, 3
    %s24 = sand.u32 %s22, 7
    %s25 = smul.addr %s23, 4
    %s26 = scalar_lea.vmem %s0, %s25
    %v27 = vld [vmem:[%s26] sm:$0xf]
    %v28 = vunpack.c.l.bf16 %v27
    %v29 = vld [vmem:[%s3] sm:$0xff]
    %31 = vset.pattern.permute.xlu0 0
    %32 = vperm.xlu0 %31, %v29
    %v33 = vpop.permute.xlu0 %32
    %v35 = vmul.f32 %v28, %v33
    %v36 = vpack.c.bf16 %v35, %v35
    %v37 = vld [vmem:[%s0] sm:$0xf]
    %38 = vmatprep.subr.bf16.mxu0 0
    %39 = vmatpush1.bf16.xpose.msra.mxu0 0
    %40 = vmatprep.subr.bf16.mxu0 0
    %41 = vmatpush1.bf16.xpose.msra.mxu0 0
    %42 = vmatprep.subr.bf16.mxu0 0
    %43 = vmatpush1.bf16.xpose.msra.mxu0 0
    %44 = vmatprep.subr.bf16.mxu0 0
    %45 = vmatpush1.bf16.xpose.msra.mxu0 0
    %46 = vmatprep.subr.bf16.mxu0 0
    %47 = vmatpush1.bf16.xpose.msra.mxu0 0
    %48 = vmatprep.subr.bf16.mxu0 0
    %49 = vmatpush1.bf16.xpose.msra.mxu0 0
    %50 = vmatprep.subr.bf16.mxu0 0
    %51 = vmatpush1.bf16.xpose.msra.mxu0 0
    %52 = vmatprep.subr.bf16.mxu0 0
    %53 = vmatpush1.bf16.xpose.msra.mxu0 %v37
    %54 = vmatprep.subr.bf16.mxu0 0
    %55 = vmatpush2.bf16.xpose.msra.mxu0 0
    %56 = vmatprep.subr.bf16.mxu0 0
    %57 = vmatpush2.bf16.xpose.msra.mxu0 0
    %58 = vmatprep.subr.bf16.mxu0 0
    %59 = vmatpush2.bf16.xpose.msra.mxu0 0
    %60 = vmatprep.subr.bf16.mxu0 0
    %61 = vmatpush2.bf16.xpose.msra.mxu0 0
    %62 = vmatprep.subr.bf16.mxu0 0
    %63 = vmatpush2.bf16.xpose.msra.mxu0 0
    %64 = vmatprep.subr.bf16.mxu0 0
    %65 = vmatpush2.bf16.xpose.msra.mxu0 0
    %66 = vmatprep.subr.bf16.mxu0 0
    %67 = vmatpush2.bf16.xpose.msra.mxu0 0
    %68 = vmatprep.subr.bf16.mxu0 0
    %69 = vmatpush2.bf16.xpose.msra.mxu0 0
    %70 = vmatprep.mubr.bf16.mxu0 0
    %71 = vmatmul.mubr.bf16.gmra.mxu0 %v36
    %v72 = vpop.f32.mrf.mxu0
    %v73 = vadd.f32 0.0, %v72
    %v74 = vpop.f32.mrf.mxu0
    %v75 = vpop.f32.mrf.mxu0
    %v76 = vpop.f32.mrf.mxu0
    %77 = vdwg.mxu0
    %v78 = vld [vmem:[%s1] sm:$0x1]
    %v80 = vlaneseq
    %v81 = vshrl.u32 %v80, 7
    %v82 = vsub.s32 0, %v81
    %v83 = vrot.slane %v78, %v82
    %v85 = vmul.f32 %v73, %v83
    %v86 = vld [vmem:[%s2] sm:$0x1]
    %v87 = vld [vmem:[%s4] sm:$0xff]
    %88 = vset.pattern.permute.xlu0 0
    %89 = vperm.xlu0 %88, %v87
    %v90 = vpop.permute.xlu0 %89
    %v91 = vlaneseq
    %v92 = vshrl.u32 %v91, 7
    %v93 = vsub.s32 0, %v92
    %v94 = vrot.slane %v86, %v93
    %vm95 = vcmp.eq.s32.totalorder %v90, %v94
    %v96 = vlaneseq
    %v97 = vand.u32 %v96, 127
    %v98 = vlaneseq
    %v99 = vshrl.u32 %v98, 7
    %v100 = vstv %s22
    %v101 = vadd.s32 %v99, %v100
    %vm102 = vcmp.lt.s32.totalorder %v97, 8
    %vm103 = vcmp.lt.s32.totalorder %v101, 8
    %vm104 = vcmp.ne.s32.totalorder %v101, %v97
    %vm105 = vcmp.lt.f32.partialorder %v85, 0.99999
    %vm106 = vmand %vm95, %vm105
    %vm107 = vmand %vm106, %vm104
    %v108 = vsel %vm102, 1, 0
    %vm109 = vcmp.eq.s32.totalorder %v108, 1
    %vm110 = vmand %vm107, %vm109
    %vm111 = vmxor %vm95, 1
    %vm112 = vmand %vm111, %vm109
    %v113 = vsel %vm110, %v85, 10.0
    %vm114 = vcmask 64512
    %v115 = vsel %vm114, %v113, inf
    %116 = vmin.xlane.f32.xlu0 %v115
    %v117 = vpop.xlane.xlu0 %116
    %v118 = vsel %vm112, %v85, -10.0
    %v119 = vsel %vm114, %v118, -inf
    %120 = vmax.xlane.f32.xlu0 %v119
    %v121 = vpop.xlane.xlu0 %120
    %vm122 = vcmp.gt.f32.partialorder %v121, -10.0
    %v123 = vsub.f32 %v85, 0.5
    %v124 = vsub.f32 %v117, 0.6
    %v125 = vadd.f32 %v121, -0.4
    %vm126 = vcmp.gt.f32.partialorder %v123, %v124
    %vm127 = vmand %vm112, %vm126
    %vm128 = vcmp.lt.f32.partialorder %v123, %v125
    %vm129 = vmxor %vm122, 1
    %v130 = vsel %vm129, 1, 0
    %vm131 = vcmp.eq.s32.totalorder %v130, 1
    %vm132 = vmor %vm128, %vm131
    %vm133 = vmand %vm110, %vm132
    %v134 = vmul.f32 %v123, -2.0
    %v135 = vmul.f32 %v123, 40.0
    %v136 = vsel %vm95, %v134, %v135
    %v137 = vmul.f32 %v136, 1.442695
    %v138 = vpow.pop %v137
    %v139 = vsel %vm133, %v138, 0.0
    %v140 = vsel %vm114, %v139, 0.0
    %141 = vadd.xlane.f32.xlu0 %v140
    %v142 = vpop.xlane.xlu0 %141
    %v143 = vsel %vm127, %v138, 0.0
    %v144 = vsel %vm114, %v143, 0.0
    %145 = vadd.xlane.f32.xlu0 %v144
    %v146 = vpop.xlane.xlu0 %145
    %vm147 = vcmp.gt.f32.partialorder %v142, 0.0
    %vm148 = vcmp.gt.f32.partialorder %v146, 0.0
    %vm149 = vmand %vm147, %vm148
    %vm150 = vmand %vm149, %vm103
    %v151 = vadd.f32 %v142, 1.0
    %v152 = vlog2.pop %v151
    %v153 = vmul.f32 %v152, 0.6931472
    %v154 = vmul.f32 %v153, 0.5
    %v155 = vadd.f32 %v146, 1.0
    %v156 = vlog2.pop %v155
    %v157 = vmul.f32 %v156, 0.6931472
    %v158 = vmul.f32 %v157, 0.025
    %v159 = vadd.f32 %v154, %v158
    %v160 = vsel %vm150, %v159, 0.0
    %vm161 = vcmask 7168
    %v162 = vsel %vm161, %v160, 0.0
    %163 = vadd.xlane.f32.xlu0 %v162
    %v164 = vpop.xlane.xlu0 %163
    %v165 = vrot.slane %v164, 4
    %v166 = vadd.f32 %v164, %v165
    %v167 = vrot.slane %v166, 2
    %v168 = vadd.f32 %v166, %v167
    %v169 = vrot.slane %v168, 1
    %v170 = vadd.f32 %v168, %v169
    %s171 = vtos %v170
    %v172 = vstv %s171
    %173 = vst [vmem:[#allocation2] sm:$0xff] %v172
    // Predicated region
    $region22: #{tpu_custom_call.1} parent=1 // pred_check
      _
    $region23: #{tpu_custom_call.1} parent=1 // pred_check_branch
      %175 = sbr.rel (0) target = $region25
    $region24: #{tpu_custom_call.1} parent=1 // pred_region
      %s177 = ssub.s32 128, 128
      %178 = vsyncadd [#allocation3], %s177
      %s180 = sshll.u32 [#allocation2], 4
      %s181 = int_to_ptr.vmem [resolvable:$true] %s180
      %183 = dma.vmem_to_hbm [thread:$0]  %s181, 128, %s5, [#allocation3]
    $region25: #{tpu_custom_call.1} parent=1 // pred_fallthru
      _
    // Predicated region
    $region26: #{tpu_custom_call.1} parent=1 // pred_check
      _
    $region27: #{tpu_custom_call.1} parent=1 // pred_check_branch
      %185 = sbr.rel (0) target = $region29
    $region28: #{tpu_custom_call.1} parent=1 // pred_region
      %186 = dma.done [#allocation3], 128
    $region29: #{tpu_custom_call.1} parent=1 // pred_fallthru
      _
    %187 = vsyncpa [#allocation3], 1

// kernel: tpu_custom_call.1
$region0: #{tpu_custom_call.1}
  #allocation0 [shape = 'u32[]', space=smem, size = 0x4, offset = 0x4, fixed_abs, tag = 'smem constant byte address 0x4 - core index']
  #allocation1 [shape = 'u32[144,128]{1,0:T(1,128)}', space=vmem, size = 0x12000, scoped, tag = 'internal scratch']
  %s0 = inlined_call_operand.vmem [shape: bf16[8,128], index: 0, kind: input, shape index: {}]
  %s1 = inlined_call_operand.vmem [shape: f32[1,8], index: 1, kind: input, shape index: {}]
  %s2 = inlined_call_operand.vmem [shape: s32[1,8], index: 2, kind: input, shape index: {}]
  %s3 = inlined_call_operand.vmem [shape: f32[8,1], index: 3, kind: input, shape index: {}]
  %s4 = inlined_call_operand.vmem [shape: s32[8,1], index: 4, kind: input, shape index: {}]
  %s5 = inlined_call_operand.hbm [shape: f32[1,8,128], index: 5, kind: output, shape index: {}]
  %s6 = sld [smem:[#allocation0]]
  $region30: #{tpu_custom_call.1} parent=0
    _
  %s8 = ssub.s32 1, %s6
  %s9 = scalar_select 0, %s8, %s6
  $region1: #{tpu_custom_call.1} parent=0
    #allocation2 [shape = 'u8[4096]{0}', space=vmem, size = 0x1000, scoped, tag = 'output window, operand 0, single buffered']
    #allocation3 [shape = 's32[1]{0}', space=sflag, size = 0x4, scoped, tag = 'scoped memory for tpu_custom_call.1']
    %10 = vsyncpa [#allocation3], 0
    // Predicated region
    $region2: #{tpu_custom_call.1} parent=1 // pred_check
      _
    $region3: #{tpu_custom_call.1} parent=1 // pred_check_branch
      %12 = sbr.rel (0) target = $region5
    $region4: #{tpu_custom_call.1} parent=1 // pred_region
      _
    $region5: #{tpu_custom_call.1} parent=1 // pred_fallthru
      _
    // Predicated region
    $region6: #{tpu_custom_call.1} parent=1 // pred_check
      _
    $region7: #{tpu_custom_call.1} parent=1 // pred_check_branch
      %14 = sbr.rel (0) target = $region9
    $region8: #{tpu_custom_call.1} parent=1 // pred_region
      _
    $region9: #{tpu_custom_call.1} parent=1 // pred_fallthru
      _
    // Predicated region
    $region10: #{tpu_custom_call.1} parent=1 // pred_check
      _
    $region11: #{tpu_custom_call.1} parent=1 // pred_check_branch
      %16 = sbr.rel (0) target = $region13
    $region12: #{tpu_custom_call.1} parent=1 // pred_region
      _
    $region13: #{tpu_custom_call.1} parent=1 // pred_fallthru
      _
    // Predicated region
    $region14: #{tpu_custom_call.1} parent=1 // pred_check
      _
    $region15: #{tpu_custom_call.1} parent=1 // pred_check_branch
      %18 = sbr.rel (0) target = $region17
    $region16: #{tpu_custom_call.1} parent=1 // pred_region
      _
    $region17: #{tpu_custom_call.1} parent=1 // pred_fallthru
      _
    // Predicated region
    $region18: #{tpu_custom_call.1} parent=1 // pred_check
      _
    $region19: #{tpu_custom_call.1} parent=1 // pred_check_branch
      %20 = sbr.rel (0) target = $region21
    $region20: #{tpu_custom_call.1} parent=1 // pred_region
      _
    $region21: #{tpu_custom_call.1} parent=1 // pred_fallthru
      _
    %s22 = smul.u32 0, 8
    %s23 = sshra.s32 %s22, 3
    %s24 = sand.u32 %s22, 7
    %s25 = smul.addr %s23, 4
    %s26 = scalar_lea.vmem %s0, %s25
    %v27 = vld [vmem:[%s26] sm:$0xf]
    %v28 = vunpack.c.l.bf16 %v27
    %v29 = vld [vmem:[%s3] sm:$0xff]
    %31 = vset.pattern.permute.xlu0 0
    %32 = vperm.xlu0 %31, %v29
    %v33 = vpop.permute.xlu0 %32
    %v35 = vmul.f32 %v28, %v33
    %v36 = vpack.c.bf16 %v35, %v35
    %v37 = vld [vmem:[%s0] sm:$0xf]
    %38 = vmatprep.subr.bf16.mxu0 0
    %39 = vmatpush1.bf16.xpose.msra.mxu0 0
    %40 = vmatprep.subr.bf16.mxu0 0
    %41 = vmatpush1.bf16.xpose.msra.mxu0 0
    %42 = vmatprep.subr.bf16.mxu0 0
    %43 = vmatpush1.bf16.xpose.msra.mxu0 0
    %44 = vmatprep.subr.bf16.mxu0 0
    %45 = vmatpush1.bf16.xpose.msra.mxu0 0
    %46 = vmatprep.subr.bf16.mxu0 0
    %47 = vmatpush1.bf16.xpose.msra.mxu0 0
    %48 = vmatprep.subr.bf16.mxu0 0
    %49 = vmatpush1.bf16.xpose.msra.mxu0 0
    %50 = vmatprep.subr.bf16.mxu0 0
    %51 = vmatpush1.bf16.xpose.msra.mxu0 0
    %52 = vmatprep.subr.bf16.mxu0 0
    %53 = vmatpush1.bf16.xpose.msra.mxu0 %v37
    %54 = vmatprep.subr.bf16.mxu0 0
    %55 = vmatpush2.bf16.xpose.msra.mxu0 0
    %56 = vmatprep.subr.bf16.mxu0 0
    %57 = vmatpush2.bf16.xpose.msra.mxu0 0
    %58 = vmatprep.subr.bf16.mxu0 0
    %59 = vmatpush2.bf16.xpose.msra.mxu0 0
    %60 = vmatprep.subr.bf16.mxu0 0
    %61 = vmatpush2.bf16.xpose.msra.mxu0 0
    %62 = vmatprep.subr.bf16.mxu0 0
    %63 = vmatpush2.bf16.xpose.msra.mxu0 0
    %64 = vmatprep.subr.bf16.mxu0 0
    %65 = vmatpush2.bf16.xpose.msra.mxu0 0
    %66 = vmatprep.subr.bf16.mxu0 0
    %67 = vmatpush2.bf16.xpose.msra.mxu0 0
    %68 = vmatprep.subr.bf16.mxu0 0
    %69 = vmatpush2.bf16.xpose.msra.mxu0 0
    %70 = vmatprep.mubr.bf16.mxu0 0
    %71 = vmatmul.mubr.bf16.gmra.mxu0 %v36
    %v72 = vpop.f32.mrf.mxu0
    %v73 = vadd.f32 0.0, %v72
    %v74 = vpop.f32.mrf.mxu0
    %v75 = vpop.f32.mrf.mxu0
    %v76 = vpop.f32.mrf.mxu0
    %77 = vdwg.mxu0
    %v78 = vld [vmem:[%s1] sm:$0x1]
    %v80 = vlaneseq
    %v81 = vshrl.u32 %v80, 7
    %v82 = vsub.s32 0, %v81
    %v83 = vrot.slane %v78, %v82
    %v85 = vmul.f32 %v73, %v83
    %v86 = vld [vmem:[%s2] sm:$0x1]
    %v87 = vld [vmem:[%s4] sm:$0xff]
    %88 = vset.pattern.permute.xlu0 0
    %89 = vperm.xlu0 %88, %v87
    %v90 = vpop.permute.xlu0 %89
    %v91 = vlaneseq
    %v92 = vshrl.u32 %v91, 7
    %v93 = vsub.s32 0, %v92
    %v94 = vrot.slane %v86, %v93
    %vm95 = vcmp.eq.s32.totalorder %v90, %v94
    %v96 = vlaneseq
    %v97 = vand.u32 %v96, 127
    %v98 = vlaneseq
    %v99 = vshrl.u32 %v98, 7
    %v100 = vstv %s22
    %v101 = vadd.s32 %v99, %v100
    %vm102 = vcmp.lt.s32.totalorder %v97, 8
    %vm103 = vcmp.lt.s32.totalorder %v101, 8
    %vm104 = vcmp.ne.s32.totalorder %v101, %v97
    %vm105 = vcmp.lt.f32.partialorder %v85, 0.99999
    %vm106 = vmand %vm95, %vm105
    %vm107 = vmand %vm106, %vm104
    %v108 = vsel %vm102, 1, 0
    %vm109 = vcmp.eq.s32.totalorder %v108, 1
    %vm110 = vmand %vm107, %vm109
    %vm111 = vmxor %vm95, 1
    %vm112 = vmand %vm111, %vm109
    %v113 = vsel %vm110, %v85, 10.0
    %vm114 = vcmask 64512
    %v115 = vsel %vm114, %v113, inf
    %116 = vmin.xlane.f32.xlu0 %v115
    %v117 = vpop.xlane.xlu0 %116
    %v118 = vsel %vm112, %v85, -10.0
    %v119 = vsel %vm114, %v118, -inf
    %120 = vmax.xlane.f32.xlu0 %v119
    %v121 = vpop.xlane.xlu0 %120
    %vm122 = vcmp.gt.f32.partialorder %v121, -10.0
    %v123 = vsub.f32 %v85, 0.5
    %v124 = vsub.f32 %v117, 0.6
    %v125 = vadd.f32 %v121, -0.4
    %vm126 = vcmp.gt.f32.partialorder %v123, %v124
    %vm127 = vmand %vm112, %vm126
    %vm128 = vcmp.lt.f32.partialorder %v123, %v125
    %vm129 = vmxor %vm122, 1
    %v130 = vsel %vm129, 1, 0
    %vm131 = vcmp.eq.s32.totalorder %v130, 1
    %vm132 = vmor %vm128, %vm131
    %vm133 = vmand %vm110, %vm132
    %v134 = vmul.f32 %v123, -2.0
    %v135 = vmul.f32 %v123, 40.0
    %v136 = vsel %vm95, %v134, %v135
    %v137 = vmul.f32 %v136, 1.442695
    %v138 = vpow.pop %v137
    %v139 = vsel %vm133, %v138, 0.0
    %v140 = vsel %vm114, %v139, 0.0
    %141 = vadd.xlane.f32.xlu0 %v140
    %v142 = vpop.xlane.xlu0 %141
    %v143 = vsel %vm127, %v138, 0.0
    %v144 = vsel %vm114, %v143, 0.0
    %145 = vadd.xlane.f32.xlu0 %v144
    %v146 = vpop.xlane.xlu0 %145
    %vm147 = vcmp.gt.f32.partialorder %v142, 0.0
    %vm148 = vcmp.gt.f32.partialorder %v146, 0.0
    %vm149 = vmand %vm147, %vm148
    %vm150 = vmand %vm149, %vm103
    %v151 = vadd.f32 %v142, 1.0
    %v152 = vlog2.pop %v151
    %v153 = vmul.f32 %v152, 0.6931472
    %v154 = vmul.f32 %v153, 0.5
    %v155 = vadd.f32 %v146, 1.0
    %v156 = vlog2.pop %v155
    %v157 = vmul.f32 %v156, 0.6931472
    %v158 = vmul.f32 %v157, 0.025
    %v159 = vadd.f32 %v154, %v158
    %v160 = vsel %vm150, %v159, 0.0
    %vm161 = vcmask 7168
    %v162 = vsel %vm161, %v160, 0.0
    %163 = vadd.xlane.f32.xlu0 %v162
    %v164 = vpop.xlane.xlu0 %163
    %v165 = vrot.slane %v164, 4
    %v166 = vadd.f32 %v164, %v165
    %v167 = vrot.slane %v166, 2
    %v168 = vadd.f32 %v166, %v167
    %v169 = vrot.slane %v168, 1
    %v170 = vadd.f32 %v168, %v169
    %s171 = vtos %v170
    %v172 = vstv %s171
    %173 = vst [vmem:[#allocation2] sm:$0xff] %v172
    // Predicated region
    $region22: #{tpu_custom_call.1} parent=1 // pred_check
      _
    $region23: #{tpu_custom_call.1} parent=1 // pred_check_branch
      %175 = sbr.rel (0) target = $region25
    $region24: #{tpu_custom_call.1} parent=1 // pred_region
      %s177 = ssub.s32 128, 128
      %178 = vsyncadd [#allocation3], %s177
      %s180 = sshll.u32 [#allocation2], 4
      %s181 = int_to_ptr.vmem [resolvable:$true] %s180
      %183 = dma.vmem_to_hbm [thread:$0]  %s181, 128, %s5, [#allocation3]
    $region25: #{tpu_custom_call.1} parent=1 // pred_fallthru
      _
    // Predicated region
    $region26: #{tpu_custom_call.1} parent=1 // pred_check
      _
    $region27: #{tpu_custom_call.1} parent=1 // pred_check_branch
      %185 = sbr.rel (0) target = $region29
    $region28: #{tpu_custom_call.1} parent=1 // pred_region
      %186 = dma.done [#allocation3], 128
    $region29: #{tpu_custom_call.1} parent=1 // pred_fallthru
      _
    %187 = vsyncpa [#allocation3], 1

</llo_original>
